<compile_context>
chip_gen: v5e
topology: v5e:2x2
jax: 0.10.0
libtpu: 0.0.40
codegen_flags: <defaults>
</compile_context>

<pallas_src>
import functools

import jax
import jax.numpy as jnp
from jax.experimental import pallas as pl
from jax.experimental.pallas import tpu as pltpu


# ---------------------------------------------------------------------------
# One-time hardware / API probes (run outside jit).
# ---------------------------------------------------------------------------

def _vmem_physical_bytes():
    """Physical VMEM per core; conservative 64 MiB (v7x-sized) fallback."""
    try:
        info = pltpu.get_tpu_info()
        for name in ("vmem_capacity_bytes", "vmem_bytes", "vmem_size_bytes"):
            val = getattr(info, name, None)
            if val:
                return int(val)
    except Exception:
        pass
    return 64 << 20


def _vmem_cap_bytes():
    # ~100 MiB on 128-MiB parts (v5e/v6e), ~56 MiB on 64-MiB parts (v7x).
    return int(min(100 << 20, _vmem_physical_bytes() - (8 << 20)))


_SINGLE_BUFFER_WEIGHTS = None


def _weights_single_buffer_supported():
    """Probe whether pipeline_mode=pl.Buffered(1) lowers on this JAX/Mosaic."""
    global _SINGLE_BUFFER_WEIGHTS
    if _SINGLE_BUFFER_WEIGHTS is not None:
        return _SINGLE_BUFFER_WEIGHTS

    def _copy_kernel(x_ref, o_ref):
        o_ref[...] = x_ref[...]

    try:
        const_spec = pl.BlockSpec((8, 128), lambda i: (0, 0),
                                  pipeline_mode=pl.Buffered(1))
        fn = pl.pallas_call(
            _copy_kernel,
            out_shape=jax.ShapeDtypeStruct((16, 128), jnp.float32),
            grid=(2,),
            in_specs=[const_spec],
            out_specs=pl.BlockSpec((8, 128), lambda i: (i, 0)),
        )
        jax.block_until_ready(fn(jnp.ones((8, 128), jnp.float32)))
        _SINGLE_BUFFER_WEIGHTS = True
    except Exception:
        _SINGLE_BUFFER_WEIGHTS = False
    return _SINGLE_BUFFER_WEIGHTS


# ---------------------------------------------------------------------------
# Kernel.
# ---------------------------------------------------------------------------

def _density_net_kernel(x_ref, w1_ref, b1_ref, w23_ref, b23_ref,
                        mu_ref, var_ref, *, n_out):
    # Hidden layer on the MXU with f32 accumulation.
    x = x_ref[...]                                                 # (TB, D)
    h = jnp.dot(x, w1_ref[...], preferred_element_type=jnp.float32)
    h = jnp.maximum(h + b1_ref[...], 0.0)                          # (1, H) bias broadcast
    # Dropout(p=0.0) / eval mode is the identity.
    # TODO(synk): training-mode dropout (p>0) would need pltpu.prng_seed +
    # pltpu.prng_random_bits; only p=0 / eval semantics are implemented.

    # Fused heads: one (H, 2*n_out) matmul producing [mu | var_raw].
    h = h.astype(w23_ref.dtype)                                    # bf16 path feeds MXU in bf16
    y = jnp.dot(h, w23_ref[...], preferred_element_type=jnp.float32) + b23_ref[...]

    mu_ref[...] = y[:, :n_out].astype(mu_ref.dtype)
    var_ref[...] = jnp.abs(y[:, n_out:]).astype(var_ref.dtype)


# ---------------------------------------------------------------------------
# Tile sizing (bytes-based, generation aware via vmem_cap).
# ---------------------------------------------------------------------------

def _choose_batch_tile(B, D, x_itemsize, out_row_bytes, weight_bytes,
                       vmem_cap, max_block_rows):
    if B < 8:
        return B                        # single block equal to the full batch dim
    row_bytes = max(1, D * x_itemsize)
    # Target ~8 MiB of x per grid step so per-step pipeline overhead amortizes.
    tb = max(8, ((8 << 20) // row_bytes) // 8 * 8)
    # Resident weights + double-buffered x/out tiles must fit under the cap.
    budget = vmem_cap - weight_bytes - (4 << 20)
    stream_row_bytes = 2 * (row_bytes + out_row_bytes)
    if budget > 0:
        tb = min(tb, max(8, (budget // stream_row_bytes) // 8 * 8))
    # Guarantee >=2 grid steps when B allows it (v7x megacore batch sharding).
    if B >= 16:
        tb = min(tb, ((pl.cdiv(B, 2) + 7) // 8) * 8)
    # Never exceed the 8-aligned batch; ragged tail handled by block overhang.
    tb = min(tb, (B // 8) * 8)
    if max_block_rows is not None:
        tb = min(tb, max(8, (max_block_rows // 8) * 8))
    return max(8, tb)


# ---------------------------------------------------------------------------
# Wrapper.
# ---------------------------------------------------------------------------

@functools.partial(
    jax.jit,
    static_argnames=("compute_dtype", "max_block_rows",
                     "single_buffer_weights", "vmem_cap"))
def _simple_density_net_impl(x, w1, b1, w2, b2, w3, b3, *,
                             compute_dtype, max_block_rows,
                             single_buffer_weights, vmem_cap):
    B, D = x.shape
    H = w1.shape[1]
    n_out = w2.shape[1]

    # Fuse the two heads into a single matmul: W23 = [W2 | W3], b23 = [b2 | b3].
    w23 = jnp.concatenate([w2, w3], axis=1)                        # (H, 2*n_out)
    b23 = jnp.concatenate([b2, b3], axis=1)                        # (1, 2*n_out)

    # Compute-dtype cast (x and weights); accumulation stays f32 in the kernel.
    xc = x.astype(compute_dtype)
    w1c = w1.astype(compute_dtype)
    w23c = w23.astype(compute_dtype)
    b1c = b1.astype(jnp.float32)
    b23c = b23.astype(jnp.float32)

    x_item = jnp.dtype(compute_dtype).itemsize
    w_buffers = 1 if single_buffer_weights else 2
    weight_bytes = w_buffers * (D * H * x_item + H * 2 * n_out * x_item
                                + (H + 2 * n_out) * 4)
    # TODO(synk): if weight_bytes exceeds the resident-VMEM budget (very large
    # D*H), add a K-reduction grid axis over D ("arbitrary") with an f32
    # accumulator scratch instead of holding W1 fully resident.

    out_row_bytes = 2 * n_out * 4                                  # mu + var rows, f32
    tb = _choose_batch_tile(B, D, x_item, out_row_bytes, weight_bytes,
                            vmem_cap, max_block_rows)
    n_blocks = pl.cdiv(B, tb)

    vmem_limit = int(min(
        vmem_cap,
        max(weight_bytes + 2 * tb * (D * x_item + out_row_bytes) + (4 << 20),
            32 << 20)))

    def _const_spec(shape):
        index_map = lambda i: (0,) * len(shape)
        if single_buffer_weights:
            return pl.BlockSpec(shape, index_map, pipeline_mode=pl.Buffered(1))
        return pl.BlockSpec(shape, index_map)

    kern = functools.partial(_density_net_kernel, n_out=n_out)

    # TODO(synk): for production 2 <= n_out < 128 with large D, zero-pad the
    # head columns to 128 lanes (and slice in the wrapper) for dense vst stores.
    mu, var = pl.pallas_call(
        kern,
        out_shape=(jax.ShapeDtypeStruct((B, n_out), jnp.float32),
                   jax.ShapeDtypeStruct((B, n_out), jnp.float32)),
        grid=(n_blocks,),
        in_specs=[
            pl.BlockSpec((tb, D), lambda i: (i, 0)),               # x: streamed batch tiles
            _const_spec((D, H)),                                   # W1 (VMEM resident)
            _const_spec((1, H)),                                   # b1
            _const_spec((H, 2 * n_out)),                           # [W2 | W3]
            _const_spec((1, 2 * n_out)),                           # [b2 | b3]
        ],
        out_specs=(pl.BlockSpec((tb, n_out), lambda i: (i, 0)),    # mu
                   pl.BlockSpec((tb, n_out), lambda i: (i, 0))),   # var
        compiler_params=pltpu.CompilerParams(
            dimension_semantics=("parallel",),                     # shard batch over v7x's 2 TCs
            vmem_limit_bytes=vmem_limit),
    )(xc, w1c, b1c, w23c, b23c)
    return mu, var


def simple_density_net(x, w1, b1, w2, b2, w3, b3, *,
                       compute_dtype=jnp.bfloat16, max_block_rows=None):
    """Forward pass of SimpleDensityNet. Returns (mu, var)."""
    return _simple_density_net_impl(
        x, w1, b1, w2, b2, w3, b3,
        compute_dtype=compute_dtype,
        max_block_rows=max_block_rows,
        single_buffer_weights=_weights_single_buffer_supported(),
        vmem_cap=_vmem_cap_bytes())


# ---------------------------------------------------------------------------
# Params / reference / demo.
# ---------------------------------------------------------------------------

def init_params(key, input_size, n_hidden, n_output):
    """Deterministic init mimicking PyTorch nn.Linear default (+-1/sqrt(fan_in))."""
    ks = jax.random.split(key, 6)

    def linear(kw, kb, fan_in, fan_out):
        bound = 1.0 / jnp.sqrt(fan_in)
        w = jax.random.uniform(kw, (fan_in, fan_out), jnp.float32, -bound, bound)
        b = jax.random.uniform(kb, (1, fan_out), jnp.float32, -bound, bound)
        return w, b

    w1, b1 = linear(ks[0], ks[1], input_size, n_hidden)
    w2, b2 = linear(ks[2], ks[3], n_hidden, n_output)
    w3, b3 = linear(ks[4], ks[5], n_hidden, n_output)
    return w1, b1, w2, b2, w3, b3


def _reference(x, w1, b1, w2, b2, w3, b3):
    h = jnp.maximum(x @ w1 + b1, 0.0)
    return h @ w2 + b2, jnp.abs(h @ w3 + b3)


if __name__ == "__main__":
    key = jax.random.PRNGKey(0)
    k_x, k_p = jax.random.split(key)

    batch, input_size, n_hidden, n_output = 10, 16, 32, 1

    x = jax.random.normal(k_x, (batch, input_size), jnp.float32)
    params = init_params(k_p, input_size, n_hidden, n_output)

    mu_ref, var_ref = _reference(x, *params)

    # f32 compute path; small tile -> 2-step grid with a ragged (unpadded) tail.
    mu, var = simple_density_net(x, *params, compute_dtype=jnp.float32,
                                 max_block_rows=8)
    jax.block_until_ready((mu, var))
    assert mu.shape == (batch, n_output) and var.shape == (batch, n_output)
    assert jnp.allclose(mu, mu_ref, atol=1e-5, rtol=1e-5)
    assert jnp.allclose(var, var_ref, atol=1e-5, rtol=1e-5)
    assert bool(jnp.all(var >= 0.0))

    # Default path: bf16 compute (f32 accumulation), byte-sized auto tile.
    mu_bf, var_bf = simple_density_net(x, *params)
    jax.block_until_ready((mu_bf, var_bf))
    assert mu_bf.shape == (batch, n_output) and var_bf.shape == (batch, n_output)
    assert jnp.allclose(mu_bf, mu_ref, atol=5e-2, rtol=5e-2)
    assert jnp.allclose(var_bf, var_ref, atol=5e-2, rtol=5e-2)
    assert bool(jnp.all(var_bf >= 0.0))

    print("KERNEL_OK")
</pallas_src>

<mosaic_0001>
module attributes {stable_mosaic.version = 11 : i64} {
  func.func @_copy_kernel(%arg0: i32, %arg1: memref<8x128xf32, #tpu.memory_space<vmem>>, %arg2: memref<8x128xf32, #tpu.memory_space<vmem>>) attributes {dimension_semantics = [#tpu.dimension_semantics<arbitrary>], iteration_bounds = array<i64: 2>, scalar_prefetch = 0 : i64, scratch_operands = 0 : i64, tpu.core_type = #tpu.core_type<tc>, window_params = [{pipeline_mode = #tpu.pipeline_mode<synchronous>, transform_indices = @transform_0, window_bounds = array<i64: 8, 128>}, {transform_indices = @transform_1, window_bounds = array<i64: 8, 128>}]} {
    %c0 = arith.constant 0 : index
    %c0_0 = arith.constant 0 : index
    %0 = vector.load %arg1[%c0, %c0_0] : memref<8x128xf32, #tpu.memory_space<vmem>>, vector<8x128xf32>
    %c0_1 = arith.constant 0 : index
    %c0_2 = arith.constant 0 : index
    %1 = vector.load %arg2[%c0_1, %c0_2] : memref<8x128xf32, #tpu.memory_space<vmem>>, vector<8x128xf32>
    tpu.vector_store %arg2[%c0_1, %c0_2], %0 {strides = array<i32>} : memref<8x128xf32, #tpu.memory_space<vmem>>, vector<8x128xf32>,
    return
  }
  func.func @transform_0(%arg0: i32) -> (i32, i32) {
    %c0_i32 = arith.constant 0 : i32
    %c0_i32_0 = arith.constant 0 : i32
    %c0_i32_1 = arith.constant 0 : i32
    return %c0_i32, %c0_i32_0 : i32, i32
  }
  func.func @transform_1(%arg0: i32) -> (i32, i32) {
    %c0_i32 = arith.constant 0 : i32
    %c0_i32_0 = arith.constant 0 : i32
    return %arg0, %c0_i32 : i32, i32
  }
}

module attributes {stable_mosaic.version = 11 : i64} {
  func.func @_density_net_kernel(%arg0: i32, %arg1: memref<8x16xf32, #tpu.memory_space<vmem>>, %arg2: memref<16x32xf32, #tpu.memory_space<vmem>>, %arg3: memref<1x32xf32, #tpu.memory_space<vmem>>, %arg4: memref<32x2xf32, #tpu.memory_space<vmem>>, %arg5: memref<1x2xf32, #tpu.memory_space<vmem>>, %arg6: memref<8x1xf32, #tpu.memory_space<vmem>>, %arg7: memref<8x1xf32, #tpu.memory_space<vmem>>) attributes {dimension_semantics = [#tpu.dimension_semantics<parallel>], iteration_bounds = array<i64: 2>, scalar_prefetch = 0 : i64, scratch_operands = 0 : i64, tpu.core_type = #tpu.core_type<tc>, window_params = [{transform_indices = @transform_0, window_bounds = array<i64: 8, 16>}, {pipeline_mode = #tpu.pipeline_mode<synchronous>, transform_indices = @transform_1, window_bounds = array<i64: 16, 32>}, {pipeline_mode = #tpu.pipeline_mode<synchronous>, transform_indices = @transform_2, window_bounds = array<i64: 1, 32>}, {pipeline_mode = #tpu.pipeline_mode<synchronous>, transform_indices = @transform_3, window_bounds = array<i64: 32, 2>}, {pipeline_mode = #tpu.pipeline_mode<synchronous>, transform_indices = @transform_4, window_bounds = array<i64: 1, 2>}, {transform_indices = @transform_5, window_bounds = array<i64: 8, 1>}, {transform_indices = @transform_6, window_bounds = array<i64: 8, 1>}]} {
    %c0 = arith.constant 0 : index
    %c0_0 = arith.constant 0 : index
    %0 = vector.load %arg1[%c0, %c0_0] : memref<8x16xf32, #tpu.memory_space<vmem>>, vector<8x16xf32>
    %c0_1 = arith.constant 0 : index
    %c0_2 = arith.constant 0 : index
    %1 = vector.load %arg2[%c0_1, %c0_2] : memref<16x32xf32, #tpu.memory_space<vmem>>, vector<16x32xf32>
    %cst = arith.constant dense<0.000000e+00> : vector<8x32xf32>
    %2 = tpu.matmul %0, %1, %cst {dimension_numbers = #tpu.dot_dimension_numbers<[1], [0], [0], [1], [0, 0, 1, 1], [], []>} : vector<8x16xf32>, vector<16x32xf32>, vector<8x32xf32> -> vector<8x32xf32>
    %c0_3 = arith.constant 0 : index
    %c0_4 = arith.constant 0 : index
    %3 = vector.load %arg3[%c0_3, %c0_4] : memref<1x32xf32, #tpu.memory_space<vmem>>, vector<1x32xf32>
    %4 = vector.broadcast %3 : vector<1x32xf32> to vector<8x32xf32>
    %5 = arith.addf %2, %4 : vector<8x32xf32>
    %cst_5 = arith.constant 0.000000e+00 : f32
    %6 = vector.broadcast %cst_5 : f32 to vector<8x32xf32>
    %7 = arith.maximumf %5, %6 : vector<8x32xf32>
    %c0_6 = arith.constant 0 : index
    %c0_7 = arith.constant 0 : index
    %8 = vector.load %arg4[%c0_6, %c0_7] : memref<32x2xf32, #tpu.memory_space<vmem>>, vector<32x2xf32>
    %cst_8 = arith.constant dense<0.000000e+00> : vector<8x2xf32>
    %9 = tpu.matmul %7, %8, %cst_8 {dimension_numbers = #tpu.dot_dimension_numbers<[1], [0], [0], [1], [0, 0, 1, 1], [], []>} : vector<8x32xf32>, vector<32x2xf32>, vector<8x2xf32> -> vector<8x2xf32>
    %c0_9 = arith.constant 0 : index
    %c0_10 = arith.constant 0 : index
    %10 = vector.load %arg5[%c0_9, %c0_10] : memref<1x2xf32, #tpu.memory_space<vmem>>, vector<1x2xf32>
    %11 = vector.broadcast %10 : vector<1x2xf32> to vector<8x2xf32>
    %12 = arith.addf %9, %11 : vector<8x2xf32>
    %13 = vector.extract_strided_slice %12 {offsets = [0, 0], sizes = [8, 1], strides = [1, 1]} : vector<8x2xf32> to vector<8x1xf32>
    %c0_11 = arith.constant 0 : index
    %c0_12 = arith.constant 0 : index
    %14 = vector.load %arg6[%c0_11, %c0_12] : memref<8x1xf32, #tpu.memory_space<vmem>>, vector<8x1xf32>
    tpu.vector_store %arg6[%c0_11, %c0_12], %13 {strides = array<i32>} : memref<8x1xf32, #tpu.memory_space<vmem>>, vector<8x1xf32>,
    %15 = vector.extract_strided_slice %12 {offsets = [0, 1], sizes = [8, 1], strides = [1, 1]} : vector<8x2xf32> to vector<8x1xf32>
    %16 = math.absf %15 : vector<8x1xf32>
    %c0_13 = arith.constant 0 : index
    %c0_14 = arith.constant 0 : index
    %17 = vector.load %arg7[%c0_13, %c0_14] : memref<8x1xf32, #tpu.memory_space<vmem>>, vector<8x1xf32>
    tpu.vector_store %arg7[%c0_13, %c0_14], %16 {strides = array<i32>} : memref<8x1xf32, #tpu.memory_space<vmem>>, vector<8x1xf32>,
    return
  }
  func.func @transform_0(%arg0: i32) -> (i32, i32) {
    %c0_i32 = arith.constant 0 : i32
    %c0_i32_0 = arith.constant 0 : i32
    return %arg0, %c0_i32 : i32, i32
  }
  func.func @transform_1(%arg0: i32) -> (i32, i32) {
    %c0_i32 = arith.constant 0 : i32
    %c0_i32_0 = arith.constant 0 : i32
    %c0_i32_1 = arith.constant 0 : i32
    return %c0_i32, %c0_i32_0 : i32, i32
  }
  func.func @transform_2(%arg0: i32) -> (i32, i32) {
    %c0_i32 = arith.constant 0 : i32
    %c0_i32_0 = arith.constant 0 : i32
    %c0_i32_1 = arith.constant 0 : i32
    return %c0_i32, %c0_i32_0 : i32, i32
  }
  func.func @transform_3(%arg0: i32) -> (i32, i32) {
    %c0_i32 = arith.constant 0 : i32
    %c0_i32_0 = arith.constant 0 : i32
    %c0_i32_1 = arith.constant 0 : i32
    return %c0_i32, %c0_i32_0 : i32, i32
  }
  func.func @transform_4(%arg0: i32) -> (i32, i32) {
    %c0_i32 = arith.constant 0 : i32
    %c0_i32_0 = arith.constant 0 : i32
    %c0_i32_1 = arith.constant 0 : i32
    return %c0_i32, %c0_i32_0 : i32, i32
  }
  func.func @transform_5(%arg0: i32) -> (i32, i32) {
    %c0_i32 = arith.constant 0 : i32
    %c0_i32_0 = arith.constant 0 : i32
    return %arg0, %c0_i32 : i32, i32
  }
  func.func @transform_6(%arg0: i32) -> (i32, i32) {
    %c0_i32 = arith.constant 0 : i32
    %c0_i32_0 = arith.constant 0 : i32
    return %arg0, %c0_i32 : i32, i32
  }
}

</mosaic_0001>

<llo_original>
// kernel: tpu_custom_call.1
$region0: #{tpu_custom_call.1}
  #allocation0 [shape = 'u32[]', space=smem, size = 0x4, offset = 0x4, fixed_abs, tag = 'smem constant byte address 0x4 - core index']
  #allocation1 [shape = 'u32[72,128]{1,0:T(1,128)}', space=vmem, size = 0x9000, scoped, tag = 'internal scratch']
  %s0 = inlined_call_operand.hbm [shape: f32[8,128], index: 0, kind: input, shape index: {}]
  %s1 = inlined_call_operand.hbm [shape: f32[16,128], index: 1, kind: output, shape index: {}]
  %s2 = sld [smem:[#allocation0]]
  $region41: #{tpu_custom_call.1} parent=0
    _
  %s4 = ssub.s32 1, %s2
  %s5 = scalar_select 0, %s4, %s2
  $region1: #{tpu_custom_call.1} parent=0
    #allocation2 [shape = 'u8[4096]{0}', space=vmem, size = 0x1000, scoped, tag = 'input window, operand 0, single buffered']
    #allocation3 [shape = 's32[2]{0}', space=sflag, size = 0x8, scoped, tag = 'scoped memory for tpu_custom_call.1']
    #allocation4 [shape = 's32[2]{0}', space=sflag, size = 0x8, scoped, tag = 'scoped memory for tpu_custom_call.1']
    #allocation5 [shape = 'u8[8192]{0}', space=vmem, size = 0x2000, scoped, tag = 'output window, operand 0']
    %6 = vsyncpa [#allocation3], 0
    %7 = vsyncpa [#allocation4], 0
    %s8 = scalar_lea.sflag [#allocation4], 1
    %9 = vsyncpa %s8, 0
    loop: start=0, step=1, limit=4
    $region2: #{tpu_custom_call.1} parent=1 // loop_pre_header
      _
    $region3: #{tpu_custom_call.1} parent=1 // loop_header
      %s11 = sphi 0, %s15
      %p12 = scmp.ge.s32.totalorder %s11, 4
      %s19 = sphi 0, %s19
      %s21 = sphi 0, %s19
      %s22 = sphi 0, %s21
      %s36 = sphi 0, %s22
      %s42 = sphi 0, %s44
      %s45 = sphi 0, %s42
      %s46 = sphi 0, %s45
      %s62 = sphi 0, %s46
    $region4: #{tpu_custom_call.1} parent=1 // loop_header_branch
      %14 = sbr.rel (%p12) target = $region8
    $region5: #{tpu_custom_call.1} parent=1 // loop_body
      %s16 = ssub.s32 %s11, 1
      %s17 = ssub.s32 %s11, 2
      %s18 = sadd.s32 %s11, 1
      %s20 = sadd.s32 %s19, 1
      %p23 = scmp.eq.s32.totalorder %s11, 1
      %p24 = scmp.ne.s32.totalorder %s19, %s21
      %p25 = scmp.eq.s32.totalorder %s11, 0
      %p26 = por %p24, %p25
      %p27 = scmp.ne.s32.totalorder %s19, %s21
      %p28 = scmp.eq.s32.totalorder %s16, 1
      %p29 = por %p27, %p28
      %p30 = scmp.ne.s32.totalorder %s21, %s22
      %p31 = scmp.eq.s32.totalorder %s16, 0
      %p32 = por %p30, %p31
      %p33 = scmp.ne.s32.totalorder %s21, %s22
      %p34 = scmp.eq.s32.totalorder %s17, 1
      %p35 = por %p33, %p34
      %p37 = scmp.ne.s32.totalorder %s22, %s36
      %p38 = scmp.eq.s32.totalorder %s17, 0
      %p39 = por %p37, %p38
      %s40 = ssub.s32 %s11, %s18
      %p41 = scmp.eq.s32.totalorder %s40, 0
      %s43 = sadd.s32 %s42, 1
      %s44 = scalar_select %p41, %s42, %s43
      %p47 = pneg %p41
      %p48 = scmp.eq.s32.totalorder %s11, 1
      %p49 = por %p47, %p48
      %p50 = scmp.ne.s32.totalorder %s42, %s45
      %p51 = scmp.eq.s32.totalorder %s11, 0
      %p52 = por %p50, %p51
      %p53 = scmp.ne.s32.totalorder %s42, %s45
      %p54 = scmp.eq.s32.totalorder %s16, 1
      %p55 = por %p53, %p54
      %p56 = scmp.ne.s32.totalorder %s45, %s46
      %p57 = scmp.eq.s32.totalorder %s16, 0
      %p58 = por %p56, %p57
      %p59 = scmp.ne.s32.totalorder %s45, %s46
      %p60 = scmp.eq.s32.totalorder %s17, 1
      %p61 = por %p59, %p60
      %p63 = scmp.ne.s32.totalorder %s46, %s62
      %p64 = scmp.eq.s32.totalorder %s17, 0
      %p65 = por %p63, %p64
      %p66 = scmp.le.s32.totalorder 1, %s11
      %p67 = scmp.lt.s32.totalorder %s11, 3
      %p68 = pnand %p66, %p67
      %p69 = pneg %p68
      // Predicated region
      $region9: #{tpu_custom_call.1} parent=5 // pred_check
        _
      $region10: #{tpu_custom_call.1} parent=5 // pred_check_branch
        %71 = sbr.rel (%p68) target = $region12
      $region11: #{tpu_custom_call.1} parent=5 // pred_region
        %s72 = ssub.s32 %s11, 1
        // Predicated region
        $region13: #{tpu_custom_call.1} parent=11 // pred_check
          %p73 = pneg %p32
        $region14: #{tpu_custom_call.1} parent=11 // pred_check_branch
          %75 = sbr.rel (%p73) target = $region16
        $region15: #{tpu_custom_call.1} parent=11 // pred_region
          %77 = vsyncadd [#allocation3], 0
          %s79 = sshll.u32 %s0, 4
          %s80 = int_to_ptr.hbm [resolvable:$true] %s79
          %s81 = sshll.u32 [#allocation2], 4
          %s82 = int_to_ptr.vmem [resolvable:$true] %s81
          %84 = dma.hbm_to_vmem [thread:$0]  %s80, 128, %s82, [#allocation3]
        $region16: #{tpu_custom_call.1} parent=11 // pred_fallthru
          _
      $region12: #{tpu_custom_call.1} parent=5 // pred_fallthru
        _
      %p85 = scmp.lt.s32.totalorder %s11, 2
      // Predicated region
      $region17: #{tpu_custom_call.1} parent=5 // pred_check
        %p86 = pneg %p85
      $region18: #{tpu_custom_call.1} parent=5 // pred_check_branch
        %88 = sbr.rel (%p86) target = $region20
      $region19: #{tpu_custom_call.1} parent=5 // pred_region
        _
      $region20: #{tpu_custom_call.1} parent=5 // pred_fallthru
        _
      %p89 = scmp.le.s32.totalorder 1, %s11
      %p90 = scmp.lt.s32.totalorder %s11, 3
      %p91 = pnand %p89, %p90
      %p92 = pneg %p91
      // Predicated region
      $region21: #{tpu_custom_call.1} parent=5 // pred_check
        _
      $region22: #{tpu_custom_call.1} parent=5 // pred_check_branch
        %94 = sbr.rel (%p91) target = $region24
      $region23: #{tpu_custom_call.1} parent=5 // pred_region
        %s95 = ssub.s32 %s11, 1
        // Predicated region
        $region25: #{tpu_custom_call.1} parent=23 // pred_check
          %p96 = pneg %p32
        $region26: #{tpu_custom_call.1} parent=23 // pred_check_branch
          %98 = sbr.rel (%p96) target = $region28
        $region27: #{tpu_custom_call.1} parent=23 // pred_region
          %100 = dma.done [#allocation3], 128
        $region28: #{tpu_custom_call.1} parent=23 // pred_fallthru
          _
        %p101 = pneg %p32
        %p102 = pneg %p29
        %p103 = pneg %p58
        %p104 = pneg %p55
        %s105 = sand.u32 %s45, 1
        %s106 = scalar_lea.sflag [#allocation4], %s105
        %s107 = sand.u32 %s45, 1
        %s108 = smul.addr %s107, 8
        %s109 = scalar_lea.vmem [#allocation5], %s108
        %v110 = vld [vmem:[#allocation2] sm:$0xff]
        %111 = vst [vmem:[%s109] sm:$0xff] %v110
        %s112 = sand.u32 %s45, 1
        %s113 = scalar_lea.sflag [#allocation4], %s112
        %s114 = sand.u32 %s45, 1
        %s115 = smul.addr %s114, 8
        %s116 = scalar_lea.vmem [#allocation5], %s115
        // Predicated region
        $region29: #{tpu_custom_call.1} parent=23 // pred_check
          %p117 = pneg %p55
        $region30: #{tpu_custom_call.1} parent=23 // pred_check_branch
          %119 = sbr.rel (%p117) target = $region32
        $region31: #{tpu_custom_call.1} parent=23 // pred_region
          %121 = vsyncadd %s113, 0
          %s122 = smul.addr %s16, 8
          %s123 = scalar_lea.hbm %s1, %s122
          %s125 = sshll.u32 %s116, 4
          %s126 = int_to_ptr.vmem [resolvable:$true] %s125
          %s127 = sshll.u32 %s123, 4
          %s128 = int_to_ptr.hbm [resolvable:$true] %s127
          %130 = dma.vmem_to_hbm [thread:$0]  %s126, 128, %s128, %s113
        $region32: #{tpu_custom_call.1} parent=23 // pred_fallthru
          _
      $region24: #{tpu_custom_call.1} parent=5 // pred_fallthru
        _
      %p131 = scmp.le.s32.totalorder 2, %s11
      // Predicated region
      $region33: #{tpu_custom_call.1} parent=5 // pred_check
        %p132 = pneg %p131
      $region34: #{tpu_custom_call.1} parent=5 // pred_check_branch
        %134 = sbr.rel (%p132) target = $region36
      $region35: #{tpu_custom_call.1} parent=5 // pred_region
        %s135 = ssub.s32 %s11, 2
        // Predicated region
        $region37: #{tpu_custom_call.1} parent=35 // pred_check
          %p136 = pneg %p61
        $region38: #{tpu_custom_call.1} parent=35 // pred_check_branch
          %138 = sbr.rel (%p136) target = $region40
        $region39: #{tpu_custom_call.1} parent=35 // pred_region
          %s139 = sand.u32 %s46, 1
          %s140 = scalar_lea.sflag [#allocation4], %s139
          %s141 = sand.u32 %s46, 1
          %s142 = smul.addr %s141, 8
          %s143 = scalar_lea.vmem [#allocation5], %s142
          %145 = dma.done %s140, 128
        $region40: #{tpu_custom_call.1} parent=35 // pred_fallthru
          _
      $region36: #{tpu_custom_call.1} parent=5 // pred_fallthru
        _
    $region6: #{tpu_custom_call.1} parent=1 // loop_footer
      %s15 = sadd.s32 1, %s11
    $region7: #{tpu_custom_call.1} parent=1 // loop_footer_branch
      %10 = sbr.rel target = $region3
    $region8: #{tpu_custom_call.1} parent=1 // loop_exit
      _
    %146 = vsyncpa [#allocation3], 1
    %s147 = scalar_lea.sflag [#allocation3], 1
    %148 = vsyncpa %s147, 1
    %149 = vsyncpa [#allocation4], 1
    %s150 = scalar_lea.sflag [#allocation4], 1
    %151 = vsyncpa %s150, 1

// kernel: _simple_density_net_impl.1
$region0: #{_simple_density_net_impl.1}
  #allocation0 [shape = 'u32[]', space=smem, size = 0x4, offset = 0x4, fixed_abs, tag = 'smem constant byte address 0x4 - core index']
  #allocation1 [shape = 'u32[72,128]{1,0:T(1,128)}', space=vmem, size = 0x9000, scoped, tag = 'internal scratch']
  %s0 = inlined_call_operand.vmem [shape: f32[10,16], index: 0, kind: input, shape index: {}]
  %s1 = inlined_call_operand.vmem [shape: f32[16,32], index: 1, kind: input, shape index: {}]
  %s2 = inlined_call_operand.vmem [shape: f32[1,32], index: 2, kind: input, shape index: {}]
  %s3 = inlined_call_operand.vmem [shape: f32[32,2], index: 3, kind: input, shape index: {}]
  %s4 = inlined_call_operand.vmem [shape: f32[1,2], index: 4, kind: input, shape index: {}]
  %s5 = inlined_call_operand.vmem [shape: f32[10,1], index: 5, kind: output, shape index: {0}]
  %s6 = inlined_call_operand.vmem [shape: f32[10,1], index: 6, kind: output, shape index: {1}]
  %7 = xla_tuple %s5, %s6
  %s8 = sld [smem:[#allocation0]]
  $region61: #{_simple_density_net_impl.1} parent=0
    _
  %s10 = ssub.s32 1, %s8
  %s11 = scalar_select 0, %s10, %s8
  loop: start=0, step=1, limit=4
  $region2: #{_simple_density_net_impl.1} parent=0 // loop_pre_header
    _
  $region3: #{_simple_density_net_impl.1} parent=0 // loop_header
    %s13 = sphi 0, %s17
    %p14 = scmp.ge.s32.totalorder %s13, 4
    %s23 = sphi 0, %s25
    %s26 = sphi 0, %s23
    %s27 = sphi 0, %s26
    %s43 = sphi 0, %s27
    %s47 = sphi 0, %s47
    %s49 = sphi 0, %s47
    %s50 = sphi 0, %s49
    %s64 = sphi 0, %s50
    %s68 = sphi 0, %s68
    %s70 = sphi 0, %s68
    %s71 = sphi 0, %s70
    %s85 = sphi 0, %s71
    %s89 = sphi 0, %s89
    %s91 = sphi 0, %s89
    %s92 = sphi 0, %s91
    %s106 = sphi 0, %s92
    %s110 = sphi 0, %s110
    %s112 = sphi 0, %s110
    %s113 = sphi 0, %s112
    %s127 = sphi 0, %s113
    %s133 = sphi 0, %s135
    %s136 = sphi 0, %s133
    %s137 = sphi 0, %s136
    %s153 = sphi 0, %s137
    %s159 = sphi 0, %s161
    %s162 = sphi 0, %s159
    %s163 = sphi 0, %s162
    %s179 = sphi 0, %s163
  $region4: #{_simple_density_net_impl.1} parent=0 // loop_header_branch
    %16 = sbr.rel (%p14) target = $region8
  $region5: #{_simple_density_net_impl.1} parent=0 // loop_body
    %s18 = ssub.s32 %s13, 1
    %s19 = ssub.s32 %s13, 2
    %s20 = sadd.s32 %s13, 1
    %s21 = ssub.s32 %s13, %s20
    %p22 = scmp.eq.s32.totalorder %s21, 0
    %s24 = sadd.s32 %s23, 1
    %s25 = scalar_select %p22, %s23, %s24
    %p28 = pneg %p22
    %p29 = scmp.eq.s32.totalorder %s13, 1
    %p30 = por %p28, %p29
    %p31 = scmp.ne.s32.totalorder %s23, %s26
    %p32 = scmp.eq.s32.totalorder %s13, 0
    %p33 = por %p31, %p32
    %p34 = scmp.ne.s32.totalorder %s23, %s26
    %p35 = scmp.eq.s32.totalorder %s18, 1
    %p36 = por %p34, %p35
    %p37 = scmp.ne.s32.totalorder %s26, %s27
    %p38 = scmp.eq.s32.totalorder %s18, 0
    %p39 = por %p37, %p38
    %p40 = scmp.ne.s32.totalorder %s26, %s27
    %p41 = scmp.eq.s32.totalorder %s19, 1
    %p42 = por %p40, %p41
    %p44 = scmp.ne.s32.totalorder %s27, %s43
    %p45 = scmp.eq.s32.totalorder %s19, 0
    %p46 = por %p44, %p45
    %s48 = sadd.s32 %s47, 1
    %p51 = scmp.eq.s32.totalorder %s13, 1
    %p52 = scmp.ne.s32.totalorder %s47, %s49
    %p53 = scmp.eq.s32.totalorder %s13, 0
    %p54 = por %p52, %p53
    %p55 = scmp.ne.s32.totalorder %s47, %s49
    %p56 = scmp.eq.s32.totalorder %s18, 1
    %p57 = por %p55, %p56
    %p58 = scmp.ne.s32.totalorder %s49, %s50
    %p59 = scmp.eq.s32.totalorder %s18, 0
    %p60 = por %p58, %p59
    %p61 = scmp.ne.s32.totalorder %s49, %s50
    %p62 = scmp.eq.s32.totalorder %s19, 1
    %p63 = por %p61, %p62
    %p65 = scmp.ne.s32.totalorder %s50, %s64
    %p66 = scmp.eq.s32.totalorder %s19, 0
    %p67 = por %p65, %p66
    %s69 = sadd.s32 %s68, 1
    %p72 = scmp.eq.s32.totalorder %s13, 1
    %p73 = scmp.ne.s32.totalorder %s68, %s70
    %p74 = scmp.eq.s32.totalorder %s13, 0
    %p75 = por %p73, %p74
    %p76 = scmp.ne.s32.totalorder %s68, %s70
    %p77 = scmp.eq.s32.totalorder %s18, 1
    %p78 = por %p76, %p77
    %p79 = scmp.ne.s32.totalorder %s70, %s71
    %p80 = scmp.eq.s32.totalorder %s18, 0
    %p81 = por %p79, %p80
    %p82 = scmp.ne.s32.totalorder %s70, %s71
    %p83 = scmp.eq.s32.totalorder %s19, 1
    %p84 = por %p82, %p83
    %p86 = scmp.ne.s32.totalorder %s71, %s85
    %p87 = scmp.eq.s32.totalorder %s19, 0
    %p88 = por %p86, %p87
    %s90 = sadd.s32 %s89, 1
    %p93 = scmp.eq.s32.totalorder %s13, 1
    %p94 = scmp.ne.s32.totalorder %s89, %s91
    %p95 = scmp.eq.s32.totalorder %s13, 0
    %p96 = por %p94, %p95
    %p97 = scmp.ne.s32.totalorder %s89, %s91
    %p98 = scmp.eq.s32.totalorder %s18, 1
    %p99 = por %p97, %p98
    %p100 = scmp.ne.s32.totalorder %s91, %s92
    %p101 = scmp.eq.s32.totalorder %s18, 0
    %p102 = por %p100, %p101
    %p103 = scmp.ne.s32.totalorder %s91, %s92
    %p104 = scmp.eq.s32.totalorder %s19, 1
    %p105 = por %p103, %p104
    %p107 = scmp.ne.s32.totalorder %s92, %s106
    %p108 = scmp.eq.s32.totalorder %s19, 0
    %p109 = por %p107, %p108
    %s111 = sadd.s32 %s110, 1
    %p114 = scmp.eq.s32.totalorder %s13, 1
    %p115 = scmp.ne.s32.totalorder %s110, %s112
    %p116 = scmp.eq.s32.totalorder %s13, 0
    %p117 = por %p115, %p116
    %p118 = scmp.ne.s32.totalorder %s110, %s112
    %p119 = scmp.eq.s32.totalorder %s18, 1
    %p120 = por %p118, %p119
    %p121 = scmp.ne.s32.totalorder %s112, %s113
    %p122 = scmp.eq.s32.totalorder %s18, 0
    %p123 = por %p121, %p122
    %p124 = scmp.ne.s32.totalorder %s112, %s113
    %p125 = scmp.eq.s32.totalorder %s19, 1
    %p126 = por %p124, %p125
    %p128 = scmp.ne.s32.totalorder %s113, %s127
    %p129 = scmp.eq.s32.totalorder %s19, 0
    %p130 = por %p128, %p129
    %s131 = ssub.s32 %s13, %s20
    %p132 = scmp.eq.s32.totalorder %s131, 0
    %s134 = sadd.s32 %s133, 1
    %s135 = scalar_select %p132, %s133, %s134
    %p138 = pneg %p132
    %p139 = scmp.eq.s32.totalorder %s13, 1
    %p140 = por %p138, %p139
    %p141 = scmp.ne.s32.totalorder %s133, %s136
    %p142 = scmp.eq.s32.totalorder %s13, 0
    %p143 = por %p141, %p142
    %p144 = scmp.ne.s32.totalorder %s133, %s136
    %p145 = scmp.eq.s32.totalorder %s18, 1
    %p146 = por %p144, %p145
    %p147 = scmp.ne.s32.totalorder %s136, %s137
    %p148 = scmp.eq.s32.totalorder %s18, 0
    %p149 = por %p147, %p148
    %p150 = scmp.ne.s32.totalorder %s136, %s137
    %p151 = scmp.eq.s32.totalorder %s19, 1
    %p152 = por %p150, %p151
    %p154 = scmp.ne.s32.totalorder %s137, %s153
    %p155 = scmp.eq.s32.totalorder %s19, 0
    %p156 = por %p154, %p155
    %s157 = ssub.s32 %s13, %s20
    %p158 = scmp.eq.s32.totalorder %s157, 0
    %s160 = sadd.s32 %s159, 1
    %s161 = scalar_select %p158, %s159, %s160
    %p164 = pneg %p158
    %p165 = scmp.eq.s32.totalorder %s13, 1
    %p166 = por %p164, %p165
    %p167 = scmp.ne.s32.totalorder %s159, %s162
    %p168 = scmp.eq.s32.totalorder %s13, 0
    %p169 = por %p167, %p168
    %p170 = scmp.ne.s32.totalorder %s159, %s162
    %p171 = scmp.eq.s32.totalorder %s18, 1
    %p172 = por %p170, %p171
    %p173 = scmp.ne.s32.totalorder %s162, %s163
    %p174 = scmp.eq.s32.totalorder %s18, 0
    %p175 = por %p173, %p174
    %p176 = scmp.ne.s32.totalorder %s162, %s163
    %p177 = scmp.eq.s32.totalorder %s19, 1
    %p178 = por %p176, %p177
    %p180 = scmp.ne.s32.totalorder %s163, %s179
    %p181 = scmp.eq.s32.totalorder %s19, 0
    %p182 = por %p180, %p181
    %p183 = scmp.le.s32.totalorder 1, %s13
    %p184 = scmp.lt.s32.totalorder %s13, 3
    %p185 = pnand %p183, %p184
    %p186 = pneg %p185
    // Predicated region
    $region9: #{_simple_density_net_impl.1} parent=5 // pred_check
      _
    $region10: #{_simple_density_net_impl.1} parent=5 // pred_check_branch
      %188 = sbr.rel (%p185) target = $region12
    $region11: #{_simple_density_net_impl.1} parent=5 // pred_region
      %s189 = ssub.s32 %s13, 1
      // Predicated region
      $region13: #{_simple_density_net_impl.1} parent=11 // pred_check
        %p190 = pneg %p60
      $region14: #{_simple_density_net_impl.1} parent=11 // pred_check_branch
        %192 = sbr.rel (%p190) target = $region16
      $region15: #{_simple_density_net_impl.1} parent=11 // pred_region
        _
      $region16: #{_simple_density_net_impl.1} parent=11 // pred_fallthru
        _
      // Predicated region
      $region17: #{_simple_density_net_impl.1} parent=11 // pred_check
        %p193 = pneg %p81
      $region18: #{_simple_density_net_impl.1} parent=11 // pred_check_branch
        %195 = sbr.rel (%p193) target = $region20
      $region19: #{_simple_density_net_impl.1} parent=11 // pred_region
        _
      $region20: #{_simple_density_net_impl.1} parent=11 // pred_fallthru
        _
      // Predicated region
      $region21: #{_simple_density_net_impl.1} parent=11 // pred_check
        %p196 = pneg %p102
      $region22: #{_simple_density_net_impl.1} parent=11 // pred_check_branch
        %198 = sbr.rel (%p196) target = $region24
      $region23: #{_simple_density_net_impl.1} parent=11 // pred_region
        _
      $region24: #{_simple_density_net_impl.1} parent=11 // pred_fallthru
        _
      // Predicated region
      $region25: #{_simple_density_net_impl.1} parent=11 // pred_check
        %p199 = pneg %p123
      $region26: #{_simple_density_net_impl.1} parent=11 // pred_check_branch
        %201 = sbr.rel (%p199) target = $region28
      $region27: #{_simple_density_net_impl.1} parent=11 // pred_region
        _
      $region28: #{_simple_density_net_impl.1} parent=11 // pred_fallthru
        _
    $region12: #{_simple_density_net_impl.1} parent=5 // pred_fallthru
      _
    %p202 = scmp.lt.s32.totalorder %s13, 2
    // Predicated region
    $region29: #{_simple_density_net_impl.1} parent=5 // pred_check
      %p203 = pneg %p202
    $region30: #{_simple_density_net_impl.1} parent=5 // pred_check_branch
      %205 = sbr.rel (%p203) target = $region32
    $region31: #{_simple_density_net_impl.1} parent=5 // pred_region
      // Predicated region
      $region33: #{_simple_density_net_impl.1} parent=31 // pred_check
        %p206 = pneg %p33
      $region34: #{_simple_density_net_impl.1} parent=31 // pred_check_branch
        %208 = sbr.rel (%p206) target = $region36
      $region35: #{_simple_density_net_impl.1} parent=31 // pred_region
        %p209 = scmp.lt.s32.totalorder %s13, 1
        %s210 = scalar_select %p209, %s13, 1
        %s211 = smul.addr %s210, 8
        %s212 = scalar_lea.vmem %s0, %s211
      $region36: #{_simple_density_net_impl.1} parent=31 // pred_fallthru
        _
    $region32: #{_simple_density_net_impl.1} parent=5 // pred_fallthru
      _
    %p213 = scmp.le.s32.totalorder 1, %s13
    %p214 = scmp.lt.s32.totalorder %s13, 3
    %p215 = pnand %p213, %p214
    %p216 = pneg %p215
    // Predicated region
    $region37: #{_simple_density_net_impl.1} parent=5 // pred_check
      _
    $region38: #{_simple_density_net_impl.1} parent=5 // pred_check_branch
      %218 = sbr.rel (%p215) target = $region40
    $region39: #{_simple_density_net_impl.1} parent=5 // pred_region
      %s219 = ssub.s32 %s13, 1
      %p220 = scmp.lt.s32.totalorder %s18, 1
      %s221 = scalar_select %p220, %s18, 1
      %s222 = smul.addr %s221, 8
      %s223 = scalar_lea.vmem %s0, %s222
      %p224 = pneg %p39
      %p225 = pneg %p36
      %p226 = pneg %p60
      %p227 = pneg %p57
      %p228 = pneg %p81
      %p229 = pneg %p78
      %p230 = pneg %p102
      %p231 = pneg %p99
      %p232 = pneg %p123
      %p233 = pneg %p120
      %p234 = pneg %p149
      %p235 = pneg %p146
      %p236 = scmp.lt.s32.totalorder %s18, 1
      %s237 = scalar_select %p236, %s18, 1
      %s238 = smul.addr %s237, 8
      %s239 = scalar_lea.vmem %s5, %s238
      %p240 = pneg %p175
      %p241 = pneg %p172
      %p242 = scmp.lt.s32.totalorder %s18, 1
      %s243 = scalar_select %p242, %s18, 1
      %s244 = smul.addr %s243, 8
      %s245 = scalar_lea.vmem %s6, %s244
      %p246 = scmp.lt.s32.totalorder %s18, 1
      %s247 = scalar_select %p246, %s18, 1
      %s248 = smul.addr %s247, 8
      %s249 = scalar_lea.vmem %s0, %s248
      %p250 = scmp.lt.s32.totalorder %s18, 1
      %s251 = scalar_select %p250, %s18, 1
      %s252 = smul.addr %s251, 8
      %s253 = scalar_lea.vmem %s5, %s252
      %p254 = scmp.lt.s32.totalorder %s18, 1
      %s255 = scalar_select %p254, %s18, 1
      %s256 = smul.addr %s255, 8
      %s257 = scalar_lea.vmem %s6, %s256
      %v258 = vld [vmem:[%s249] sm:$0xff]
      %v259 = vld [vmem:[%s1] sm:$0xff]
      %v260 = vld [vmem:[%s1 + $0x8] sm:$0xff]
      %v261 = vld [vmem:[%s2] sm:$0x1]
      %v263 = vperm.slane %v261, 0
      %vm265 = vcmask 130048
      %v267 = vsel %vm265, %v258, 0
      %269 = vmatpush.msra.mxu0 0.0
      %270 = vmatpush.msra.mxu0 0.0
      %271 = vmatpush.msra.mxu0 0.0
      %272 = vmatpush.msra.mxu0 0.0
      %273 = vmatpush.msra.mxu0 0.0
      %274 = vmatpush.msra.mxu0 0.0
      %275 = vmatpush.msra.mxu0 0.0
      %276 = vmatpush.msra.mxu0 0.0
      %277 = vmatpush.msra.mxu0 0.0
      %278 = vmatpush.msra.mxu0 0.0
      %279 = vmatpush.msra.mxu0 0.0
      %280 = vmatpush.msra.mxu0 0.0
      %281 = vmatpush.msra.mxu0 0.0
      %282 = vmatpush.msra.mxu0 0.0
      %283 = vmatpush.msra.mxu0 %v260
      %284 = vmatpush.msra.mxu0 %v259
      %285 = vmatmul.f32.gmra.mxu0 %v267
      %v286 = vpop.f32.mrf.mxu0
      %v287 = vadd.f32 %v263, %v286
      %288 = vdwg.mxu0
      %v289 = vmax.f32 %v287, 0.0
      %v290 = vld [vmem:[%s3] sm:$0xff]
      %v291 = vld [vmem:[%s3 + $0x8] sm:$0xff]
      %v292 = vld [vmem:[%s3 + $0x10] sm:$0xff]
      %v293 = vld [vmem:[%s3 + $0x18] sm:$0xff]
      %v294 = vld [vmem:[%s4] sm:$0x1]
      %v296 = vperm.slane %v294, 0
      %vm298 = vcmask 261120
      %v300 = vsel %vm298, %v289, 0
      %302 = vmatpush.msra.mxu0 0.0
      %303 = vmatpush.msra.mxu0 0.0
      %304 = vmatpush.msra.mxu0 0.0
      %305 = vmatpush.msra.mxu0 0.0
      %306 = vmatpush.msra.mxu0 0.0
      %307 = vmatpush.msra.mxu0 0.0
      %308 = vmatpush.msra.mxu0 0.0
      %309 = vmatpush.msra.mxu0 0.0
      %310 = vmatpush.msra.mxu0 0.0
      %311 = vmatpush.msra.mxu0 0.0
      %312 = vmatpush.msra.mxu0 0.0
      %313 = vmatpush.msra.mxu0 0.0
      %314 = vmatpush.msra.mxu0 %v293
      %315 = vmatpush.msra.mxu0 %v292
      %316 = vmatpush.msra.mxu0 %v291
      %317 = vmatpush.msra.mxu0 %v290
      %318 = vmatmul.f32.gmra.mxu0 %v300
      %v319 = vpop.f32.mrf.mxu0
      %v320 = vadd.f32 %v296, %v319
      %321 = vdwg.mxu0
      %vm322 = vcmask 7168
      %323 = vst.msk [vmem:[%s253] sm:$0xff] %vm322, %v320
      %v324 = vand.u32 2147483647, %v320
      %326 = vrot.lane.b32.xlu0 %v324, 127
      %v327 = vpop.permute.xlu0 %326
      %329 = vst.msk [vmem:[%s257] sm:$0xff] %vm322, %v327
      %p330 = scmp.lt.s32.totalorder %s18, 1
      %s331 = scalar_select %p330, %s18, 1
      %s332 = smul.addr %s331, 8
      %s333 = scalar_lea.vmem %s5, %s332
      %p334 = scmp.lt.s32.totalorder %s18, 1
      %s335 = scalar_select %p334, %s18, 1
      %s336 = smul.addr %s335, 8
      %s337 = scalar_lea.vmem %s6, %s336
      // Predicated region
      $region41: #{_simple_density_net_impl.1} parent=39 // pred_check
        %p338 = pneg %p146
      $region42: #{_simple_density_net_impl.1} parent=39 // pred_check_branch
        %340 = sbr.rel (%p338) target = $region44
      $region43: #{_simple_density_net_impl.1} parent=39 // pred_region
        _
      $region44: #{_simple_density_net_impl.1} parent=39 // pred_fallthru
        _
      // Predicated region
      $region45: #{_simple_density_net_impl.1} parent=39 // pred_check
        %p341 = pneg %p172
      $region46: #{_simple_density_net_impl.1} parent=39 // pred_check_branch
        %343 = sbr.rel (%p341) target = $region48
      $region47: #{_simple_density_net_impl.1} parent=39 // pred_region
        _
      $region48: #{_simple_density_net_impl.1} parent=39 // pred_fallthru
        _
    $region40: #{_simple_density_net_impl.1} parent=5 // pred_fallthru
      _
    %p344 = scmp.le.s32.totalorder 2, %s13
    // Predicated region
    $region49: #{_simple_density_net_impl.1} parent=5 // pred_check
      %p345 = pneg %p344
    $region50: #{_simple_density_net_impl.1} parent=5 // pred_check_branch
      %347 = sbr.rel (%p345) target = $region52
    $region51: #{_simple_density_net_impl.1} parent=5 // pred_region
      %s348 = ssub.s32 %s13, 2
      // Predicated region
      $region53: #{_simple_density_net_impl.1} parent=51 // pred_check
        %p349 = pneg %p152
      $region54: #{_simple_density_net_impl.1} parent=51 // pred_check_branch
        %351 = sbr.rel (%p349) target = $region56
      $region55: #{_simple_density_net_impl.1} parent=51 // pred_region
        %p352 = scmp.lt.s32.totalorder %s19, 1
        %s353 = scalar_select %p352, %s19, 1
        %s354 = smul.addr %s353, 8
        %s355 = scalar_lea.vmem %s5, %s354
      $region56: #{_simple_density_net_impl.1} parent=51 // pred_fallthru
        _
      // Predicated region
      $region57: #{_simple_density_net_impl.1} parent=51 // pred_check
        %p356 = pneg %p178
      $region58: #{_simple_density_net_impl.1} parent=51 // pred_check_branch
        %358 = sbr.rel (%p356) target = $region60
      $region59: #{_simple_density_net_impl.1} parent=51 // pred_region
        %p359 = scmp.lt.s32.totalorder %s19, 1
        %s360 = scalar_select %p359, %s19, 1
        %s361 = smul.addr %s360, 8
        %s362 = scalar_lea.vmem %s6, %s361
      $region60: #{_simple_density_net_impl.1} parent=51 // pred_fallthru
        _
    $region52: #{_simple_density_net_impl.1} parent=5 // pred_fallthru
      _
  $region6: #{_simple_density_net_impl.1} parent=0 // loop_footer
    %s17 = sadd.s32 1, %s13
  $region7: #{_simple_density_net_impl.1} parent=0 // loop_footer_branch
    %12 = sbr.rel target = $region3
  $region8: #{_simple_density_net_impl.1} parent=0 // loop_exit
    _

</llo_original>
